<compile_context>
chip_gen: v7x
topology: tpu7x:2x2x1
jax: 0.10.0
libtpu: 0.0.40
codegen_flags: <defaults>
</compile_context>

<pallas_src>
import functools

import jax
import jax.numpy as jnp
from jax.experimental import pallas as pl
from jax.experimental.pallas import tpu as pltpu


def _round_up(x, m):
    return ((x + m - 1) // m) * m


def _hidden_align():
    """MXU-native tile width for the hidden (weights-only) dim."""
    try:
        kind = jax.devices()[0].device_kind.lower()
    except Exception:
        return 128
    return 256 if ("v6" in kind or "v7" in kind) else 128


# Scoped-VMEM request: above the 16/32 MiB defaults, below v7x's 64 MiB physical.
_VMEM_LIMIT_BYTES = 56 * 1024 * 1024
# Tile-sizing budget: leave headroom under the limit for Mosaic internal scratch.
_TILE_BUDGET_BYTES = 44 * 1024 * 1024


def sample_decoder_kernel(x_ref, w1_ref, b1_ref, w2_ref, b2_ref, o_ref):
    # mlp1: cast x to the MXU operand dtype (VPU cast hides under MXU work),
    # accumulate in f32; bias-add + ReLU stay f32 (v5e has no bf16 VPU).
    x = x_ref[...].astype(w1_ref.dtype)
    h = jnp.dot(x, w1_ref[...], preferred_element_type=jnp.float32)
    h = jnp.maximum(h + b1_ref[...], 0.0)
    # mlp2: cast activation back to the MXU operand dtype, accumulate in f32.
    out = jnp.dot(h.astype(w2_ref.dtype), w2_ref[...],
                  preferred_element_type=jnp.float32)
    out = jnp.maximum(out + b2_ref[...], 0.0)
    o_ref[...] = out.astype(o_ref.dtype)


def prepare_decoder_params(w1, b1, w2, b2, *, compute_dtype=jnp.bfloat16):
    """Pad + cast weights ONCE at init (keeps HBM pad/cast out of the hot path).

    w1: (F, H); b1: (H,) or (1, H); w2: (H, F); b2: (F,) or (1, F).
    Returns (w1p, b1p, w2p, b2p) with F padded to 128 (so lane-aligned x can
    stream unpadded) and H padded to the MXU-native width.
    """
    F, H = w1.shape
    Fp = _round_up(F, 128)
    Hp = _round_up(H, _hidden_align())
    cdt = compute_dtype
    w1p = jnp.zeros((Fp, Hp), cdt).at[:F, :H].set(w1.astype(cdt))
    w2p = jnp.zeros((Hp, Fp), cdt).at[:H, :F].set(w2.astype(cdt))
    # Biases stay f32 (f32 VPU epilogue; required for v5e, harmless elsewhere).
    b1p = jnp.zeros((1, Hp), jnp.float32).at[:, :H].set(
        b1.reshape(1, H).astype(jnp.float32))
    b2p = jnp.zeros((1, Fp), jnp.float32).at[:, :F].set(
        b2.reshape(1, F).astype(jnp.float32))
    return w1p, b1p, w2p, b2p


@functools.partial(jax.jit, static_argnames=("block_b",))
def sample_decoder(x, w1p, b1p, w2p, b2p, *, block_b=512):
    """x: (B, F) f32; padded params from prepare_decoder_params. Returns (B, F)."""
    B, F = x.shape
    Fp, Hp = w1p.shape
    out_dtype = x.dtype
    cdt = w1p.dtype

    # ---- input path: stream f32 x directly when already lane-aligned ----
    if F == Fp:
        x_in = x                               # no pad/cast round trip in HBM
    else:
        # Must pad the contraction dim; cast to bf16 while materializing so the
        # kernel re-reads 2 B/elem instead of 4.
        x_in = jnp.zeros((B, Fp), cdt).at[:, :F].set(x.astype(cdt))

    # ---- batch tile sizing ----
    TB = min(max(8, (block_b // 8) * 8), _round_up(B, 8))
    if B >= 16:
        # v7x megacore: keep >= 2 tiles on the "parallel" batch axis.
        TB = min(TB, _round_up(pl.cdiv(B, 2), 8))

    # VMEM budget: double-buffered x/out tiles + single-buffered weights +
    # the f32 (TB, Hp) intermediate must fit the scoped limit.
    w_bytes = ((w1p.size + w2p.size) * jnp.dtype(cdt).itemsize
               + (b1p.size + b2p.size) * 4)
    row_bytes = (2 * Fp * jnp.dtype(x_in.dtype).itemsize   # x, double buffered
                 + 2 * Fp * jnp.dtype(out_dtype).itemsize  # out, double buffered
                 + Hp * 4)                                 # f32 intermediate h
    tile_budget = _TILE_BUDGET_BYTES - w_bytes
    if tile_budget >= 8 * row_bytes:
        TB = min(TB, max(8, (tile_budget // row_bytes) // 8 * 8))
    else:
        # TODO(synk): for very large F/H the resident bf16 weights alone blow
        # the budget (esp. v7x's 64 MiB VMEM); add a grid axis over H with an
        # f32 accumulator + pl.when init/finalize instead of full residency.
        TB = 8

    grid = (pl.cdiv(B, TB),)

    cost = pl.CostEstimate(
        flops=4 * B * Fp * Hp,                              # two matmuls
        transcendentals=0,
        bytes_accessed=(x_in.size * jnp.dtype(x_in.dtype).itemsize
                        + B * Fp * jnp.dtype(out_dtype).itemsize
                        + w_bytes),
    )

    out_p = pl.pallas_call(
        sample_decoder_kernel,
        out_shape=jax.ShapeDtypeStruct((B, Fp), out_dtype),
        grid_spec=pltpu.PrefetchScalarGridSpec(
            num_scalar_prefetch=0,
            grid=grid,
            in_specs=[
                # x: streamed per batch tile (default double buffering).
                pl.BlockSpec((TB, Fp), lambda i: (i, 0)),
                # weights/biases: resident (constant index map), DMA'd once ->
                # single buffer to halve their VMEM footprint.
                pl.BlockSpec((Fp, Hp), lambda i: (0, 0),
                             pipeline_mode=pl.Buffered(1)),
                pl.BlockSpec((1, Hp), lambda i: (0, 0),
                             pipeline_mode=pl.Buffered(1)),
                pl.BlockSpec((Hp, Fp), lambda i: (0, 0),
                             pipeline_mode=pl.Buffered(1)),
                pl.BlockSpec((1, Fp), lambda i: (0, 0),
                             pipeline_mode=pl.Buffered(1)),
            ],
            out_specs=pl.BlockSpec((TB, Fp), lambda i: (i, 0)),
        ),
        compiler_params=pltpu.CompilerParams(
            dimension_semantics=("parallel",),   # batch tiles split across TCs
            vmem_limit_bytes=_VMEM_LIMIT_BYTES,
        ),
        cost_estimate=cost,
    )(x_in, w1p, b1p, w2p, b2p)

    if Fp != F:
        out_p = out_p[:, :F]                     # drop lane padding only if added
    return out_p


def _reference(x, w1, b1, w2, b2):
    # Same math as the kernel: bf16 MXU operands, f32 accumulation + f32 epilogue.
    h = jnp.maximum(
        jnp.dot(x.astype(jnp.bfloat16), w1.astype(jnp.bfloat16),
                preferred_element_type=jnp.float32) + b1.reshape(1, -1), 0.0)
    return jnp.maximum(
        jnp.dot(h.astype(jnp.bfloat16), w2.astype(jnp.bfloat16),
                preferred_element_type=jnp.float32) + b2.reshape(1, -1), 0.0)


def _run_case(batch, feature_size, hidden_size, seed):
    key = jax.random.PRNGKey(seed)
    k_x, k_w1, k_b1, k_w2, k_b2 = jax.random.split(key, 5)
    x = jax.random.normal(k_x, (batch, feature_size), dtype=jnp.float32)

    # Deterministic parameter init (nn.Linear-style uniform bounds).
    bound1 = 1.0 / (feature_size ** 0.5)
    w1 = jax.random.uniform(k_w1, (feature_size, hidden_size),
                            minval=-bound1, maxval=bound1, dtype=jnp.float32)
    b1 = jax.random.uniform(k_b1, (hidden_size,),
                            minval=-bound1, maxval=bound1, dtype=jnp.float32)
    bound2 = 1.0 / (hidden_size ** 0.5)
    w2 = jax.random.uniform(k_w2, (hidden_size, feature_size),
                            minval=-bound2, maxval=bound2, dtype=jnp.float32)
    b2 = jax.random.uniform(k_b2, (feature_size,),
                            minval=-bound2, maxval=bound2, dtype=jnp.float32)

    params = prepare_decoder_params(w1, b1, w2, b2)   # once, at "init"
    out = sample_decoder(x, *params)
    jax.block_until_ready(out)
    assert out.shape == (batch, feature_size)

    ref = _reference(x, w1, b1, w2, b2)
    assert jnp.allclose(out, ref, atol=1e-4, rtol=1e-4), \
        float(jnp.max(jnp.abs(out - ref)))
    # Sanity vs. full-f32 math (tolerance sized for bf16 operands).
    ref_f32 = jnp.maximum(jnp.maximum(x @ w1 + b1, 0.0) @ w2 + b2, 0.0)
    assert jnp.allclose(out, ref_f32, atol=5e-2, rtol=5e-2)


if __name__ == "__main__":
    # Small shapes consistent with the module's forward.
    _run_case(batch=8, feature_size=32, hidden_size=64, seed=0)      # padded path
    _run_case(batch=16, feature_size=128, hidden_size=256, seed=1)   # direct-stream path, 2 batch tiles
    print("KERNEL_OK")
</pallas_src>

<mosaic_0001>
module attributes {stable_mosaic.version = 11 : i64} {
  func.func @sample_decoder_kernel(%arg0: i32, %arg1: memref<8x128xbf16, #tpu.memory_space<vmem>>, %arg2: memref<128x128xbf16, #tpu.memory_space<vmem>>, %arg3: memref<1x128xf32, #tpu.memory_space<vmem>>, %arg4: memref<128x128xbf16, #tpu.memory_space<vmem>>, %arg5: memref<1x128xf32, #tpu.memory_space<vmem>>, %arg6: memref<8x128xf32, #tpu.memory_space<vmem>>) attributes {dimension_semantics = [#tpu.dimension_semantics<parallel>], iteration_bounds = array<i64: 1>, scalar_prefetch = 0 : i64, scratch_operands = 0 : i64, tpu.core_type = #tpu.core_type<tc>, window_params = [{transform_indices = @transform_0, window_bounds = array<i64: 8, 128>}, {pipeline_mode = #tpu.pipeline_mode<synchronous>, transform_indices = @transform_1, window_bounds = array<i64: 128, 128>}, {pipeline_mode = #tpu.pipeline_mode<synchronous>, transform_indices = @transform_2, window_bounds = array<i64: 1, 128>}, {pipeline_mode = #tpu.pipeline_mode<synchronous>, transform_indices = @transform_3, window_bounds = array<i64: 128, 128>}, {pipeline_mode = #tpu.pipeline_mode<synchronous>, transform_indices = @transform_4, window_bounds = array<i64: 1, 128>}, {transform_indices = @transform_5, window_bounds = array<i64: 8, 128>}]} {
    %c0 = arith.constant 0 : index
    %c0_0 = arith.constant 0 : index
    %0 = vector.load %arg1[%c0, %c0_0] : memref<8x128xbf16, #tpu.memory_space<vmem>>, vector<8x128xbf16>
    %c0_1 = arith.constant 0 : index
    %c0_2 = arith.constant 0 : index
    %1 = vector.load %arg2[%c0_1, %c0_2] : memref<128x128xbf16, #tpu.memory_space<vmem>>, vector<128x128xbf16>
    %cst = arith.constant dense<0.000000e+00> : vector<8x128xf32>
    %2 = tpu.matmul %0, %1, %cst {dimension_numbers = #tpu.dot_dimension_numbers<[1], [0], [0], [1], [0, 0, 1, 1], [], []>} : vector<8x128xbf16>, vector<128x128xbf16>, vector<8x128xf32> -> vector<8x128xf32>
    %c0_3 = arith.constant 0 : index
    %c0_4 = arith.constant 0 : index
    %3 = vector.load %arg3[%c0_3, %c0_4] : memref<1x128xf32, #tpu.memory_space<vmem>>, vector<1x128xf32>
    %4 = vector.broadcast %3 : vector<1x128xf32> to vector<8x128xf32>
    %5 = arith.addf %2, %4 : vector<8x128xf32>
    %cst_5 = arith.constant 0.000000e+00 : f32
    %6 = vector.broadcast %cst_5 : f32 to vector<8x128xf32>
    %7 = arith.maximumf %5, %6 : vector<8x128xf32>
    %8 = arith.truncf %7 : vector<8x128xf32> to vector<8x128xbf16>
    %c0_6 = arith.constant 0 : index
    %c0_7 = arith.constant 0 : index
    %9 = vector.load %arg4[%c0_6, %c0_7] : memref<128x128xbf16, #tpu.memory_space<vmem>>, vector<128x128xbf16>
    %cst_8 = arith.constant dense<0.000000e+00> : vector<8x128xf32>
    %10 = tpu.matmul %8, %9, %cst_8 {dimension_numbers = #tpu.dot_dimension_numbers<[1], [0], [0], [1], [0, 0, 1, 1], [], []>} : vector<8x128xbf16>, vector<128x128xbf16>, vector<8x128xf32> -> vector<8x128xf32>
    %c0_9 = arith.constant 0 : index
    %c0_10 = arith.constant 0 : index
    %11 = vector.load %arg5[%c0_9, %c0_10] : memref<1x128xf32, #tpu.memory_space<vmem>>, vector<1x128xf32>
    %12 = vector.broadcast %11 : vector<1x128xf32> to vector<8x128xf32>
    %13 = arith.addf %10, %12 : vector<8x128xf32>
    %cst_11 = arith.constant 0.000000e+00 : f32
    %14 = vector.broadcast %cst_11 : f32 to vector<8x128xf32>
    %15 = arith.maximumf %13, %14 : vector<8x128xf32>
    %c0_12 = arith.constant 0 : index
    %c0_13 = arith.constant 0 : index
    %16 = vector.load %arg6[%c0_12, %c0_13] : memref<8x128xf32, #tpu.memory_space<vmem>>, vector<8x128xf32>
    tpu.vector_store %arg6[%c0_12, %c0_13], %15 {strides = array<i32>} : memref<8x128xf32, #tpu.memory_space<vmem>>, vector<8x128xf32>,
    return
  }
  func.func @transform_0(%arg0: i32) -> (i32, i32) {
    %c0_i32 = arith.constant 0 : i32
    %c0_i32_0 = arith.constant 0 : i32
    return %arg0, %c0_i32 : i32, i32
  }
  func.func @transform_1(%arg0: i32) -> (i32, i32) {
    %c0_i32 = arith.constant 0 : i32
    %c0_i32_0 = arith.constant 0 : i32
    %c0_i32_1 = arith.constant 0 : i32
    return %c0_i32, %c0_i32_0 : i32, i32
  }
  func.func @transform_2(%arg0: i32) -> (i32, i32) {
    %c0_i32 = arith.constant 0 : i32
    %c0_i32_0 = arith.constant 0 : i32
    %c0_i32_1 = arith.constant 0 : i32
    return %c0_i32, %c0_i32_0 : i32, i32
  }
  func.func @transform_3(%arg0: i32) -> (i32, i32) {
    %c0_i32 = arith.constant 0 : i32
    %c0_i32_0 = arith.constant 0 : i32
    %c0_i32_1 = arith.constant 0 : i32
    return %c0_i32, %c0_i32_0 : i32, i32
  }
  func.func @transform_4(%arg0: i32) -> (i32, i32) {
    %c0_i32 = arith.constant 0 : i32
    %c0_i32_0 = arith.constant 0 : i32
    %c0_i32_1 = arith.constant 0 : i32
    return %c0_i32, %c0_i32_0 : i32, i32
  }
  func.func @transform_5(%arg0: i32) -> (i32, i32) {
    %c0_i32 = arith.constant 0 : i32
    %c0_i32_0 = arith.constant 0 : i32
    return %arg0, %c0_i32 : i32, i32
  }
}

</mosaic_0001>

<llo_original>
// kernel: sample_decoder.1
$region0: #{sample_decoder.1}
  #allocation0 [shape = 'u32[]', space=smem, size = 0x4, offset = 0x4, fixed_abs, tag = 'smem constant byte address 0x4 - core index']
  #allocation1 [shape = 'u32[144,128]{1,0:T(1,128)}', space=vmem, size = 0x12000, scoped, tag = 'internal scratch']
  %s0 = inlined_call_operand.vmem [shape: bf16[8,128], index: 0, kind: input, shape index: {}]
  %s1 = inlined_call_operand.hbm [shape: bf16[128,128], index: 1, kind: input, shape index: {}]
  %s2 = inlined_call_operand.vmem [shape: f32[1,128], index: 2, kind: input, shape index: {}]
  %s3 = inlined_call_operand.hbm [shape: bf16[128,128], index: 3, kind: input, shape index: {}]
  %s4 = inlined_call_operand.vmem [shape: f32[1,128], index: 4, kind: input, shape index: {}]
  %s5 = inlined_call_operand.hbm [shape: f32[8,128], index: 5, kind: output, shape index: {}]
  %s6 = sld [smem:[#allocation0]]
  $region38: #{sample_decoder.1} parent=0
    _
  %s8 = ssub.s32 1, %s6
  %s9 = scalar_select 0, %s8, %s6
  $region1: #{sample_decoder.1} parent=0
    #allocation2 [shape = 'u8[32768]{0}', space=vmem, size = 0x8000, scoped, tag = 'input window, operand 1, single buffered']
    #allocation3 [shape = 's32[1]{0}', space=sflag, size = 0x4, scoped, tag = 'scoped memory for sample_decoder.1']
    #allocation4 [shape = 's32[1]{0}', space=sflag, size = 0x4, scoped, tag = 'scoped memory for sample_decoder.1']
    #allocation5 [shape = 'u8[32768]{0}', space=vmem, size = 0x8000, scoped, tag = 'input window, operand 3, single buffered']
    #allocation6 [shape = 's32[1]{0}', space=sflag, size = 0x4, scoped, tag = 'scoped memory for sample_decoder.1']
    #allocation7 [shape = 'u8[4096]{0}', space=vmem, size = 0x1000, scoped, tag = 'output window, operand 0, single buffered']
    %10 = vsyncpa [#allocation3], 0
    %11 = vsyncpa [#allocation6], 0
    %12 = vsyncpa [#allocation4], 0
    // Predicated region
    $region2: #{sample_decoder.1} parent=1 // pred_check
      _
    $region3: #{sample_decoder.1} parent=1 // pred_check_branch
      %14 = sbr.rel (0) target = $region5
    $region4: #{sample_decoder.1} parent=1 // pred_region
      _
    $region5: #{sample_decoder.1} parent=1 // pred_fallthru
      _
    // Predicated region
    $region6: #{sample_decoder.1} parent=1 // pred_check
      _
    $region7: #{sample_decoder.1} parent=1 // pred_check_branch
      %16 = sbr.rel (0) target = $region9
    $region8: #{sample_decoder.1} parent=1 // pred_region
      %s18 = ssub.s32 1024, 1024
      %19 = vsyncadd [#allocation3], %s18
      %s20 = sshll.u32 [#allocation2], 4
      %s21 = int_to_ptr.vmem [resolvable:$true] %s20
      %26 = dma.hbm_to_vmem [thread:$0]  %s1, 1024, %s21, [#allocation3], 64, 64, 4
    $region9: #{sample_decoder.1} parent=1 // pred_fallthru
      _
    // Predicated region
    $region10: #{sample_decoder.1} parent=1 // pred_check
      _
    $region11: #{sample_decoder.1} parent=1 // pred_check_branch
      %28 = sbr.rel (0) target = $region13
    $region12: #{sample_decoder.1} parent=1 // pred_region
      _
    $region13: #{sample_decoder.1} parent=1 // pred_fallthru
      _
    // Predicated region
    $region14: #{sample_decoder.1} parent=1 // pred_check
      _
    $region15: #{sample_decoder.1} parent=1 // pred_check_branch
      %30 = sbr.rel (0) target = $region17
    $region16: #{sample_decoder.1} parent=1 // pred_region
      %s32 = ssub.s32 1024, 1024
      %33 = vsyncadd [#allocation6], %s32
      %s34 = sshll.u32 [#allocation5], 4
      %s35 = int_to_ptr.vmem [resolvable:$true] %s34
      %40 = dma.hbm_to_vmem [thread:$0]  %s3, 1024, %s35, [#allocation6], 64, 64, 4
    $region17: #{sample_decoder.1} parent=1 // pred_fallthru
      _
    // Predicated region
    $region18: #{sample_decoder.1} parent=1 // pred_check
      _
    $region19: #{sample_decoder.1} parent=1 // pred_check_branch
      %42 = sbr.rel (0) target = $region21
    $region20: #{sample_decoder.1} parent=1 // pred_region
      _
    $region21: #{sample_decoder.1} parent=1 // pred_fallthru
      _
    // Predicated region
    $region22: #{sample_decoder.1} parent=1 // pred_check
      _
    $region23: #{sample_decoder.1} parent=1 // pred_check_branch
      %44 = sbr.rel (0) target = $region25
    $region24: #{sample_decoder.1} parent=1 // pred_region
      %45 = dma.done [#allocation3], 1024
    $region25: #{sample_decoder.1} parent=1 // pred_fallthru
      _
    // Predicated region
    $region26: #{sample_decoder.1} parent=1 // pred_check
      _
    $region27: #{sample_decoder.1} parent=1 // pred_check_branch
      %47 = sbr.rel (0) target = $region29
    $region28: #{sample_decoder.1} parent=1 // pred_region
      %48 = dma.done [#allocation6], 1024
    $region29: #{sample_decoder.1} parent=1 // pred_fallthru
      _
    %v50 = vld [vmem:[%s0] sm:$0xf]
    %v51 = vld [vmem:[#allocation2] sm:$0xf]
    %v52 = vld [vmem:[#allocation2 + $0x4] sm:$0xf]
    %v53 = vld [vmem:[#allocation2 + $0x8] sm:$0xf]
    %v54 = vld [vmem:[#allocation2 + $0xc] sm:$0xf]
    %v55 = vld [vmem:[#allocation2 + $0x10] sm:$0xf]
    %v56 = vld [vmem:[#allocation2 + $0x14] sm:$0xf]
    %v57 = vld [vmem:[#allocation2 + $0x18] sm:$0xf]
    %v58 = vld [vmem:[#allocation2 + $0x1c] sm:$0xf]
    %v59 = vld [vmem:[#allocation2 + $0x20] sm:$0xf]
    %v60 = vld [vmem:[#allocation2 + $0x24] sm:$0xf]
    %v61 = vld [vmem:[#allocation2 + $0x28] sm:$0xf]
    %v62 = vld [vmem:[#allocation2 + $0x2c] sm:$0xf]
    %v63 = vld [vmem:[#allocation2 + $0x30] sm:$0xf]
    %v64 = vld [vmem:[#allocation2 + $0x34] sm:$0xf]
    %v65 = vld [vmem:[#allocation2 + $0x38] sm:$0xf]
    %v66 = vld [vmem:[#allocation2 + $0x3c] sm:$0xf]
    %v67 = vld [vmem:[%s2] sm:$0x1]
    %v69 = vlaneseq
    %v70 = vshrl.u32 %v69, 7
    %v71 = vsub.s32 0, %v70
    %v72 = vrot.slane %v67, %v71
    %v90 = vunpack.c.l.b16 %v51
    %v91 = vunpack.c.l.b16 %v52
    %v92 = vunpack.c.l.b16 %v53
    %v93 = vunpack.c.l.b16 %v54
    %v94 = vunpack.c.l.b16 %v55
    %v95 = vunpack.c.l.b16 %v56
    %v96 = vunpack.c.l.b16 %v57
    %v97 = vunpack.c.l.b16 %v58
    %v98 = vunpack.c.l.b16 %v59
    %v99 = vunpack.c.l.b16 %v60
    %v100 = vunpack.c.l.b16 %v61
    %v101 = vunpack.c.l.b16 %v62
    %v102 = vunpack.c.l.b16 %v63
    %v103 = vunpack.c.l.b16 %v64
    %v104 = vunpack.c.l.b16 %v65
    %v105 = vunpack.c.l.b16 %v66
    %v106 = vpack.c.b16 %v91, %v90
    %v107 = vpack.c.b16 %v93, %v92
    %v108 = vpack.c.b16 %v95, %v94
    %v109 = vpack.c.b16 %v97, %v96
    %v110 = vpack.c.b16 %v99, %v98
    %v111 = vpack.c.b16 %v101, %v100
    %v112 = vpack.c.b16 %v103, %v102
    %v113 = vpack.c.b16 %v105, %v104
    %122 = vmatprep.subr.bf16.mxu0 0
    %123 = vmatpush1.bf16.msra.mxu0 %v106
    %124 = vmatprep.subr.bf16.mxu0 0
    %125 = vmatpush1.bf16.msra.mxu0 %v107
    %126 = vmatprep.subr.bf16.mxu0 0
    %127 = vmatpush1.bf16.msra.mxu0 %v108
    %128 = vmatprep.subr.bf16.mxu0 0
    %129 = vmatpush1.bf16.msra.mxu0 %v109
    %130 = vmatprep.subr.bf16.mxu0 0
    %131 = vmatpush1.bf16.msra.mxu0 %v110
    %132 = vmatprep.subr.bf16.mxu0 0
    %133 = vmatpush1.bf16.msra.mxu0 %v111
    %134 = vmatprep.subr.bf16.mxu0 0
    %135 = vmatpush1.bf16.msra.mxu0 %v112
    %136 = vmatprep.subr.bf16.mxu0 0
    %137 = vmatpush1.bf16.msra.mxu0 %v113
    %138 = vmatprep.subr.bf16.mxu0 0
    %139 = vmatpush1.bf16.msra.mxu0 0
    %140 = vmatprep.subr.bf16.mxu0 0
    %141 = vmatpush1.bf16.msra.mxu0 0
    %142 = vmatprep.subr.bf16.mxu0 0
    %143 = vmatpush1.bf16.msra.mxu0 0
    %144 = vmatprep.subr.bf16.mxu0 0
    %145 = vmatpush1.bf16.msra.mxu0 0
    %146 = vmatprep.subr.bf16.mxu0 0
    %147 = vmatpush1.bf16.msra.mxu0 0
    %148 = vmatprep.subr.bf16.mxu0 0
    %149 = vmatpush1.bf16.msra.mxu0 0
    %150 = vmatprep.subr.bf16.mxu0 0
    %151 = vmatpush1.bf16.msra.mxu0 0
    %152 = vmatprep.subr.bf16.mxu0 0
    %153 = vmatpush1.bf16.msra.mxu0 0
    %154 = vmatprep.mubr.bf16.mxu0 0
    %155 = vmatmul.mubr.bf16.gmra.mrb[0].mxu0 %v50
    %v156 = vpop.f32.mrb[0].mxu0
    %v157 = vadd.f32 %v72, %v156
    %v158 = vpop.f32.mrb[0].mxu0
    %v159 = vpop.f32.mrb[0].mxu0
    %v160 = vpop.f32.mrb[0].mxu0
    %161 = vdwg.mxu0
    %v162 = vmax.f32 %v157, 0.0
    %v163 = vpack.c.bf16 %v162, %v162
    %v164 = vld [vmem:[#allocation5] sm:$0xf]
    %v165 = vld [vmem:[#allocation5 + $0x4] sm:$0xf]
    %v166 = vld [vmem:[#allocation5 + $0x8] sm:$0xf]
    %v167 = vld [vmem:[#allocation5 + $0xc] sm:$0xf]
    %v168 = vld [vmem:[#allocation5 + $0x10] sm:$0xf]
    %v169 = vld [vmem:[#allocation5 + $0x14] sm:$0xf]
    %v170 = vld [vmem:[#allocation5 + $0x18] sm:$0xf]
    %v171 = vld [vmem:[#allocation5 + $0x1c] sm:$0xf]
    %v172 = vld [vmem:[#allocation5 + $0x20] sm:$0xf]
    %v173 = vld [vmem:[#allocation5 + $0x24] sm:$0xf]
    %v174 = vld [vmem:[#allocation5 + $0x28] sm:$0xf]
    %v175 = vld [vmem:[#allocation5 + $0x2c] sm:$0xf]
    %v176 = vld [vmem:[#allocation5 + $0x30] sm:$0xf]
    %v177 = vld [vmem:[#allocation5 + $0x34] sm:$0xf]
    %v178 = vld [vmem:[#allocation5 + $0x38] sm:$0xf]
    %v179 = vld [vmem:[#allocation5 + $0x3c] sm:$0xf]
    %v180 = vld [vmem:[%s4] sm:$0x1]
    %v182 = vlaneseq
    %v183 = vshrl.u32 %v182, 7
    %v184 = vsub.s32 0, %v183
    %v185 = vrot.slane %v180, %v184
    %v203 = vunpack.c.l.b16 %v164
    %v204 = vunpack.c.l.b16 %v165
    %v205 = vunpack.c.l.b16 %v166
    %v206 = vunpack.c.l.b16 %v167
    %v207 = vunpack.c.l.b16 %v168
    %v208 = vunpack.c.l.b16 %v169
    %v209 = vunpack.c.l.b16 %v170
    %v210 = vunpack.c.l.b16 %v171
    %v211 = vunpack.c.l.b16 %v172
    %v212 = vunpack.c.l.b16 %v173
    %v213 = vunpack.c.l.b16 %v174
    %v214 = vunpack.c.l.b16 %v175
    %v215 = vunpack.c.l.b16 %v176
    %v216 = vunpack.c.l.b16 %v177
    %v217 = vunpack.c.l.b16 %v178
    %v218 = vunpack.c.l.b16 %v179
    %v219 = vpack.c.b16 %v204, %v203
    %v220 = vpack.c.b16 %v206, %v205
    %v221 = vpack.c.b16 %v208, %v207
    %v222 = vpack.c.b16 %v210, %v209
    %v223 = vpack.c.b16 %v212, %v211
    %v224 = vpack.c.b16 %v214, %v213
    %v225 = vpack.c.b16 %v216, %v215
    %v226 = vpack.c.b16 %v218, %v217
    %235 = vmatprep.subr.bf16.mxu0 0
    %236 = vmatpush1.bf16.msra.mxu0 %v219
    %237 = vmatprep.subr.bf16.mxu0 0
    %238 = vmatpush1.bf16.msra.mxu0 %v220
    %239 = vmatprep.subr.bf16.mxu0 0
    %240 = vmatpush1.bf16.msra.mxu0 %v221
    %241 = vmatprep.subr.bf16.mxu0 0
    %242 = vmatpush1.bf16.msra.mxu0 %v222
    %243 = vmatprep.subr.bf16.mxu0 0
    %244 = vmatpush1.bf16.msra.mxu0 %v223
    %245 = vmatprep.subr.bf16.mxu0 0
    %246 = vmatpush1.bf16.msra.mxu0 %v224
    %247 = vmatprep.subr.bf16.mxu0 0
    %248 = vmatpush1.bf16.msra.mxu0 %v225
    %249 = vmatprep.subr.bf16.mxu0 0
    %250 = vmatpush1.bf16.msra.mxu0 %v226
    %251 = vmatprep.subr.bf16.mxu0 0
    %252 = vmatpush1.bf16.msra.mxu0 0
    %253 = vmatprep.subr.bf16.mxu0 0
    %254 = vmatpush1.bf16.msra.mxu0 0
    %255 = vmatprep.subr.bf16.mxu0 0
    %256 = vmatpush1.bf16.msra.mxu0 0
    %257 = vmatprep.subr.bf16.mxu0 0
    %258 = vmatpush1.bf16.msra.mxu0 0
    %259 = vmatprep.subr.bf16.mxu0 0
    %260 = vmatpush1.bf16.msra.mxu0 0
    %261 = vmatprep.subr.bf16.mxu0 0
    %262 = vmatpush1.bf16.msra.mxu0 0
    %263 = vmatprep.subr.bf16.mxu0 0
    %264 = vmatpush1.bf16.msra.mxu0 0
    %265 = vmatprep.subr.bf16.mxu0 0
    %266 = vmatpush1.bf16.msra.mxu0 0
    %267 = vmatprep.mubr.bf16.mxu0 0
    %268 = vmatmul.mubr.bf16.gmra.mrb[0].mxu0 %v163
    %v269 = vpop.f32.mrb[0].mxu0
    %v270 = vadd.f32 %v185, %v269
    %v271 = vpop.f32.mrb[0].mxu0
    %v272 = vpop.f32.mrb[0].mxu0
    %v273 = vpop.f32.mrb[0].mxu0
    %274 = vdwg.mxu0
    %v275 = vmax.f32 %v270, 0.0
    %276 = vst [vmem:[#allocation7] sm:$0xff] %v275
    // Predicated region
    $region30: #{sample_decoder.1} parent=1 // pred_check
      _
    $region31: #{sample_decoder.1} parent=1 // pred_check_branch
      %278 = sbr.rel (0) target = $region33
    $region32: #{sample_decoder.1} parent=1 // pred_region
      %s280 = ssub.s32 128, 128
      %281 = vsyncadd [#allocation4], %s280
      %s283 = sshll.u32 [#allocation7], 4
      %s284 = int_to_ptr.vmem [resolvable:$true] %s283
      %286 = dma.vmem_to_hbm [thread:$0]  %s284, 128, %s5, [#allocation4]
    $region33: #{sample_decoder.1} parent=1 // pred_fallthru
      _
    // Predicated region
    $region34: #{sample_decoder.1} parent=1 // pred_check
      _
    $region35: #{sample_decoder.1} parent=1 // pred_check_branch
      %288 = sbr.rel (0) target = $region37
    $region36: #{sample_decoder.1} parent=1 // pred_region
      %289 = dma.done [#allocation4], 128
    $region37: #{sample_decoder.1} parent=1 // pred_fallthru
      _
    %290 = vsyncpa [#allocation3], 1
    %291 = vsyncpa [#allocation6], 1
    %292 = vsyncpa [#allocation4], 1

</llo_original>
